<compile_context>
chip_gen: v7x
topology: tpu7x:2x2x1
jax: 0.10.0
libtpu: 0.0.40
codegen_flags: <defaults>
</compile_context>

<pallas_src>
import functools

import jax
import jax.numpy as jnp
from jax.experimental import pallas as pl
from jax.experimental.pallas import tpu as pltpu


_LANE = 128
_SUBLANE = 8


def _round_up(x, m):
    return ((x + m - 1) // m) * m


def _cdiv(a, b):
    return (a + b - 1) // b


def _scalar_to_block(partial):
    """Place a scalar at [0, 0] of an (8, 128) block, zeros elsewhere."""
    r = jax.lax.broadcasted_iota(jnp.int32, (_SUBLANE, _LANE), 0)
    c = jax.lax.broadcasted_iota(jnp.int32, (_SUBLANE, _LANE), 1)
    return jnp.where((r == 0) & (c == 0), partial, 0.0).astype(jnp.float32)


def _nmae_kernel_lane_dense(pred_t_ref, labels_ref, psum_ref, *, batch, tile_b):
    """Small-C path: pred transposed, block (C, TILE_B); labels block (1, TILE_B)."""
    x = pred_t_ref[...].astype(jnp.float32)                          # (C, TILE_B)
    c = x.shape[0]

    # Numerically-stable softmax over the (sublane) class axis.
    m = jnp.max(x, axis=0, keepdims=True)                            # (1, TILE_B)
    ex = jnp.exp(x - m)                                              # EUP
    denom = jnp.sum(ex, axis=0, keepdims=True)                       # (1, TILE_B)

    # one-hot(label) via a single (C, 1) iota broadcast against (1, TILE_B).
    class_ids = jax.lax.broadcasted_iota(jnp.int32, (c, 1), 0)
    one_hot = class_ids == labels_ref[...]                           # (C, TILE_B)
    label_ex = jnp.sum(jnp.where(one_hot, ex, 0.0), axis=0, keepdims=True)

    loss = 1.0 - label_ex / denom                                    # (1, TILE_B)

    # Mask padded batch columns so the in-kernel partial sum is exact.
    col = pl.program_id(0) * tile_b + jax.lax.broadcasted_iota(
        jnp.int32, (1, tile_b), 1)
    loss = jnp.where(col < batch, loss, 0.0)

    psum_ref[...] = _scalar_to_block(jnp.sum(loss))


def _nmae_kernel_row_major(pred_ref, labels_ref, psum_ref, *, batch, tile_b):
    """Wide-C path (C >= 128, already lane-dense): block (TILE_B, C)."""
    x = pred_ref[...].astype(jnp.float32)                            # (TILE_B, C)
    c = x.shape[1]

    m = jnp.max(x, axis=-1, keepdims=True)                           # (TILE_B, 1)
    ex = jnp.exp(x - m)
    denom = jnp.sum(ex, axis=-1, keepdims=True)

    class_ids = jax.lax.broadcasted_iota(jnp.int32, (1, c), 1)       # (1, C)
    one_hot = class_ids == labels_ref[...]                           # (TILE_B, C)
    label_ex = jnp.sum(jnp.where(one_hot, ex, 0.0), axis=-1, keepdims=True)

    loss = 1.0 - label_ex / denom                                    # (TILE_B, 1)

    row = pl.program_id(0) * tile_b + jax.lax.broadcasted_iota(
        jnp.int32, (tile_b, 1), 0)
    loss = jnp.where(row < batch, loss, 0.0)

    psum_ref[...] = _scalar_to_block(jnp.sum(loss))


def nmae_forward(pred, labels, *, scale=1.0, pred_transposed=False,
                 block_budget_bytes=2 << 20):
    """NMAE loss.  pred: (B, C) float (or (C, B) if pred_transposed),
    labels: (B,) int.  Returns a scalar."""
    if pred_transposed:
        C, B = pred.shape
    else:
        B, C = pred.shape
    labels = labels.reshape(B).astype(jnp.int32)

    lane_dense = C < _LANE    # small class count -> put batch on the lane axis

    if lane_dense:
        # Padded VMEM block is (round_up(C,8), tile_b) f32; keep it ~2 MiB so
        # double-buffered inputs + elementwise intermediates stay well inside
        # v7x's 64 MiB VMEM while still amortizing per-step pipeline overhead.
        c_pad = _round_up(C, _SUBLANE)
        tile_cap = max(_LANE, (block_budget_bytes // (4 * c_pad)) // _LANE * _LANE)
        half_b = _round_up(_cdiv(B, 2), _LANE)          # >=2 tiles for v7x megacore
        tile_b = max(_LANE, min(tile_cap, half_b, _round_up(B, _LANE)))

        B_pad = _round_up(B, tile_b)
        num_tiles = B_pad // tile_b

        # NOTE: callers that already hold class-major logits can pass
        # pred_transposed=True and skip this XLA transpose entirely.
        pred_t = pred if pred_transposed else pred.T                 # (C, B)
        if B_pad != B:
            pred_t = jnp.pad(pred_t, ((0, 0), (0, B_pad - B)))
            labels = jnp.pad(labels, (0, B_pad - B))
        labels2d = labels.reshape(1, B_pad)

        kernel = functools.partial(_nmae_kernel_lane_dense, batch=B, tile_b=tile_b)
        in_specs = [
            pl.BlockSpec((C, tile_b), lambda i: (0, i)),
            pl.BlockSpec((1, tile_b), lambda i: (0, i)),
        ]
        operands = (pred_t, labels2d)
    else:
        if pred_transposed:
            pred = pred.T
        c_lanes = _round_up(C, _LANE)
        tile_cap = max(_SUBLANE,
                       (block_budget_bytes // (4 * c_lanes)) // _SUBLANE * _SUBLANE)
        half_b = _round_up(_cdiv(B, 2), _SUBLANE)
        tile_b = max(_SUBLANE, min(tile_cap, half_b, _round_up(B, _SUBLANE)))

        B_pad = _round_up(B, tile_b)
        num_tiles = B_pad // tile_b
        if B_pad != B:
            pred = jnp.pad(pred, ((0, B_pad - B), (0, 0)))
            labels = jnp.pad(labels, (0, B_pad - B))
        labels2d = labels.reshape(B_pad, 1)

        kernel = functools.partial(_nmae_kernel_row_major, batch=B, tile_b=tile_b)
        in_specs = [
            pl.BlockSpec((tile_b, C), lambda i: (i, 0)),
            pl.BlockSpec((tile_b, 1), lambda i: (i, 0)),
        ]
        operands = (pred, labels2d)

    # One (8, 128) partial-sum block per tile (partial at [0, 0], zeros
    # elsewhere) -> tiny writeback, "parallel" grid preserved.
    psums = pl.pallas_call(
        kernel,
        out_shape=jax.ShapeDtypeStruct((_SUBLANE, num_tiles * _LANE), jnp.float32),
        grid=(num_tiles,),
        in_specs=in_specs,
        out_specs=pl.BlockSpec((_SUBLANE, _LANE), lambda i: (0, i)),
        compiler_params=pltpu.CompilerParams(
            dimension_semantics=("parallel",),
            vmem_limit_bytes=40 << 20,
        ),
    )(*operands)

    norm = 1.0 / (C - 1)
    return (scale * norm / B) * jnp.sum(psums)


def _reference(pred, labels, *, num_classes, scale=1.0):
    """Pure-JAX mirror of the PyTorch NMAE forward."""
    p = jax.nn.softmax(pred, axis=1)
    one_hot = jax.nn.one_hot(labels, num_classes, dtype=p.dtype)
    norm = 1.0 / (num_classes - 1)
    loss = 1.0 - jnp.sum(one_hot * p, axis=1)
    return scale * norm * jnp.mean(loss)


if __name__ == "__main__":
    key = jax.random.PRNGKey(0)

    # 1) Module-default configuration: num_classes=10, small batch
    #    (exercises the lane-dense small-C path + batch-padding mask).
    B, C = 8, 10
    scale = 1.0
    kp, kl, key = jax.random.split(key, 3)
    pred = jax.random.normal(kp, (B, C), dtype=jnp.float32)
    labels = jax.random.randint(kl, (B,), 0, C, dtype=jnp.int32)

    out = nmae_forward(pred, labels, scale=scale)
    out = jax.block_until_ready(out)
    ref = _reference(pred, labels, num_classes=C, scale=scale)
    assert out.shape == ()
    assert jnp.allclose(out, ref, atol=1e-5, rtol=1e-5), (out, ref)

    # 2) Wide-class configuration (exercises the row-major path + masking).
    B2, C2 = 200, 256
    kp2, kl2 = jax.random.split(key)
    pred2 = jax.random.normal(kp2, (B2, C2), dtype=jnp.float32)
    labels2 = jax.random.randint(kl2, (B2,), 0, C2, dtype=jnp.int32)

    out2 = nmae_forward(pred2, labels2, scale=0.5)
    out2 = jax.block_until_ready(out2)
    ref2 = _reference(pred2, labels2, num_classes=C2, scale=0.5)
    assert jnp.allclose(out2, ref2, atol=1e-5, rtol=1e-5), (out2, ref2)

    print("KERNEL_OK")
</pallas_src>

<mosaic_0001>
module attributes {stable_mosaic.version = 11 : i64} {
  func.func @_nmae_kernel_lane_dense(%arg0: i32, %arg1: memref<10x128xf32, #tpu.memory_space<vmem>>, %arg2: memref<1x128xi32, #tpu.memory_space<vmem>>, %arg3: memref<8x128xf32, #tpu.memory_space<vmem>>) attributes {dimension_semantics = [#tpu.dimension_semantics<parallel>], iteration_bounds = array<i64: 1>, scalar_prefetch = 0 : i64, scratch_operands = 0 : i64, tpu.core_type = #tpu.core_type<tc>, window_params = [{transform_indices = @transform_0, window_bounds = array<i64: 10, 128>}, {transform_indices = @transform_1, window_bounds = array<i64: 1, 128>}, {transform_indices = @transform_2, window_bounds = array<i64: 8, 128>}]} {
    %c0 = arith.constant 0 : index
    %c0_0 = arith.constant 0 : index
    %0 = vector.load %arg1[%c0, %c0_0] : memref<10x128xf32, #tpu.memory_space<vmem>>, vector<10x128xf32>
    %cst = arith.constant dense<0xFF800000> : vector<128xf32>
    %1 = vector.multi_reduction <maximumf>, %0, %cst [0] : vector<10x128xf32> to vector<128xf32>
    %2 = vector.shape_cast %1 : vector<128xf32> to vector<1x128xf32>
    %3 = vector.broadcast %2 : vector<1x128xf32> to vector<10x128xf32>
    %4 = arith.subf %0, %3 : vector<10x128xf32>
    %5 = math.exp %4 : vector<10x128xf32>
    %cst_1 = arith.constant dense<0.000000e+00> : vector<128xf32>
    %6 = vector.multi_reduction <add>, %5, %cst_1 [0] : vector<10x128xf32> to vector<128xf32>
    %7 = vector.shape_cast %6 : vector<128xf32> to vector<1x128xf32>
    %8 = tpu.iota {dimensions = array<i32: 0>} : vector<10x1xi32>
    %c0_2 = arith.constant 0 : index
    %c0_3 = arith.constant 0 : index
    %9 = vector.load %arg2[%c0_2, %c0_3] : memref<1x128xi32, #tpu.memory_space<vmem>>, vector<1x128xi32>
    %10 = vector.broadcast %8 : vector<10x1xi32> to vector<10x128xi32>
    %11 = vector.broadcast %9 : vector<1x128xi32> to vector<10x128xi32>
    %12 = arith.cmpi eq, %10, %11 : vector<10x128xi32>
    %cst_4 = arith.constant 0.000000e+00 : f32
    %13 = vector.broadcast %cst_4 : f32 to vector<10x128xf32>
    %14 = arith.select %12, %5, %13 : vector<10x128xi1>, vector<10x128xf32>
    %cst_5 = arith.constant dense<0.000000e+00> : vector<128xf32>
    %15 = vector.multi_reduction <add>, %14, %cst_5 [0] : vector<10x128xf32> to vector<128xf32>
    %16 = vector.shape_cast %15 : vector<128xf32> to vector<1x128xf32>
    %17 = arith.divf %16, %7 : vector<1x128xf32>
    %cst_6 = arith.constant 1.000000e+00 : f32
    %18 = vector.broadcast %cst_6 : f32 to vector<1x128xf32>
    %19 = arith.subf %18, %17 : vector<1x128xf32>
    %c128_i32 = arith.constant 128 : i32
    %20 = arith.muli %arg0, %c128_i32 : i32
    %21 = tpu.iota {dimensions = array<i32: 1>} : vector<1x128xi32>
    %22 = vector.broadcast %20 : i32 to vector<1x128xi32>
    %23 = arith.addi %22, %21 : vector<1x128xi32>
    %c8_i32 = arith.constant 8 : i32
    %24 = vector.broadcast %c8_i32 : i32 to vector<1x128xi32>
    %25 = arith.cmpi slt, %23, %24 : vector<1x128xi32>
    %cst_7 = arith.constant 0.000000e+00 : f32
    %26 = vector.broadcast %cst_7 : f32 to vector<1x128xf32>
    %27 = arith.select %25, %19, %26 : vector<1x128xi1>, vector<1x128xf32>
    %28 = vector.shape_cast %27 : vector<1x128xf32> to vector<1x1x128xf32>
    %cst_8 = arith.constant dense<0.000000e+00> : vector<1xf32>
    %29 = vector.multi_reduction <add>, %28, %cst_8 [1, 2] : vector<1x1x128xf32> to vector<1xf32>
    %30 = vector.shape_cast %29 : vector<1xf32> to vector<1x1x1xf32>
    %31 = vector.extract %30[0, 0, 0] : f32 from vector<1x1x1xf32>
    %32 = tpu.iota {dimensions = array<i32: 0>} : vector<8x128xi32>
    %33 = tpu.iota {dimensions = array<i32: 1>} : vector<8x128xi32>
    %c0_i32 = arith.constant 0 : i32
    %34 = vector.broadcast %c0_i32 : i32 to vector<8x128xi32>
    %35 = arith.cmpi eq, %32, %34 : vector<8x128xi32>
    %c0_i32_9 = arith.constant 0 : i32
    %36 = vector.broadcast %c0_i32_9 : i32 to vector<8x128xi32>
    %37 = arith.cmpi eq, %33, %36 : vector<8x128xi32>
    %38 = arith.andi %35, %37 : vector<8x128xi1>
    %cst_10 = arith.constant 0.000000e+00 : f32
    %39 = vector.broadcast %31 : f32 to vector<8x128xf32>
    %40 = vector.broadcast %cst_10 : f32 to vector<8x128xf32>
    %41 = arith.select %38, %39, %40 : vector<8x128xi1>, vector<8x128xf32>
    %c0_11 = arith.constant 0 : index
    %c0_12 = arith.constant 0 : index
    %42 = vector.load %arg3[%c0_11, %c0_12] : memref<8x128xf32, #tpu.memory_space<vmem>>, vector<8x128xf32>
    tpu.vector_store %arg3[%c0_11, %c0_12], %41 {strides = array<i32>} : memref<8x128xf32, #tpu.memory_space<vmem>>, vector<8x128xf32>,
    return
  }
  func.func @transform_0(%arg0: i32) -> (i32, i32) {
    %c0_i32 = arith.constant 0 : i32
    %c0_i32_0 = arith.constant 0 : i32
    return %c0_i32, %arg0 : i32, i32
  }
  func.func @transform_1(%arg0: i32) -> (i32, i32) {
    %c0_i32 = arith.constant 0 : i32
    %c0_i32_0 = arith.constant 0 : i32
    return %c0_i32, %arg0 : i32, i32
  }
  func.func @transform_2(%arg0: i32) -> (i32, i32) {
    %c0_i32 = arith.constant 0 : i32
    %c0_i32_0 = arith.constant 0 : i32
    return %c0_i32, %arg0 : i32, i32
  }
}

</mosaic_0001>

<llo_original>
// kernel: tpu_custom_call.1
$region0: #{tpu_custom_call.1}
  #allocation0 [shape = 'u32[]', space=smem, size = 0x4, offset = 0x4, fixed_abs, tag = 'smem constant byte address 0x4 - core index']
  #allocation1 [shape = 'u32[144,128]{1,0:T(1,128)}', space=vmem, size = 0x12000, scoped, tag = 'internal scratch']
  %s0 = inlined_call_operand.hbm [shape: f32[10,128], index: 0, kind: input, shape index: {}]
  %s1 = inlined_call_operand.vmem [shape: s32[1,128], index: 1, kind: input, shape index: {}]
  %s2 = inlined_call_operand.hbm [shape: f32[8,128], index: 2, kind: output, shape index: {}]
  %s3 = sld [smem:[#allocation0]]
  $region22: #{tpu_custom_call.1} parent=0
    _
  %s5 = ssub.s32 1, %s3
  %s6 = scalar_select 0, %s5, %s3
  $region1: #{tpu_custom_call.1} parent=0
    #allocation2 [shape = 'u8[8192]{0}', space=vmem, size = 0x2000, scoped, tag = 'input window, operand 0, single buffered']
    #allocation3 [shape = 's32[1]{0}', space=sflag, size = 0x4, scoped, tag = 'scoped memory for tpu_custom_call.1']
    #allocation4 [shape = 's32[1]{0}', space=sflag, size = 0x4, scoped, tag = 'scoped memory for tpu_custom_call.1']
    #allocation5 [shape = 'u8[4096]{0}', space=vmem, size = 0x1000, scoped, tag = 'output window, operand 0, single buffered']
    %7 = vsyncpa [#allocation3], 0
    %8 = vsyncpa [#allocation4], 0
    // Predicated region
    $region2: #{tpu_custom_call.1} parent=1 // pred_check
      _
    $region3: #{tpu_custom_call.1} parent=1 // pred_check_branch
      %10 = sbr.rel (0) target = $region5
    $region4: #{tpu_custom_call.1} parent=1 // pred_region
      %s12 = ssub.s32 256, 256
      %13 = vsyncadd [#allocation3], %s12
      %s14 = sshll.u32 [#allocation2], 4
      %s15 = int_to_ptr.vmem [resolvable:$true] %s14
      %20 = dma.hbm_to_vmem [thread:$0]  %s0, 256, %s15, [#allocation3], 128, 128, 8
    $region5: #{tpu_custom_call.1} parent=1 // pred_fallthru
      _
    // Predicated region
    $region6: #{tpu_custom_call.1} parent=1 // pred_check
      _
    $region7: #{tpu_custom_call.1} parent=1 // pred_check_branch
      %22 = sbr.rel (0) target = $region9
    $region8: #{tpu_custom_call.1} parent=1 // pred_region
      _
    $region9: #{tpu_custom_call.1} parent=1 // pred_fallthru
      _
    // Predicated region
    $region10: #{tpu_custom_call.1} parent=1 // pred_check
      _
    $region11: #{tpu_custom_call.1} parent=1 // pred_check_branch
      %24 = sbr.rel (0) target = $region13
    $region12: #{tpu_custom_call.1} parent=1 // pred_region
      %25 = dma.done [#allocation3], 256
    $region13: #{tpu_custom_call.1} parent=1 // pred_fallthru
      _
    %v26 = vld [vmem:[#allocation2] sm:$0xff]
    %v27 = vld [vmem:[#allocation2 + $0x8] sm:$0x3]
    %vm28 = vcmask 1041408
    %v29 = vsel %vm28, %v27, -inf
    %v30 = vmax.f32 %v26, %v29
    %v31 = vrot.slane %v30, 4
    %v32 = vmax.f32 %v30, %v31
    %v33 = vrot.slane %v32, 2
    %v34 = vmax.f32 %v32, %v33
    %v35 = vrot.slane %v34, 1
    %v36 = vmax.f32 %v34, %v35
    %v37 = vsub.f32 %v26, %v36
    %v38 = vsub.f32 %v27, %v36
    %v39 = vmul.f32 %v37, 1.442695
    %v40 = vpow.pop %v39
    %v41 = vmul.f32 %v38, 1.442695
    %v42 = vpow.pop %v41
    %v43 = vsel %vm28, %v42, 0.0
    %v44 = vadd.f32 %v40, %v43
    %v45 = vrot.slane %v44, 4
    %v46 = vadd.f32 %v44, %v45
    %v47 = vrot.slane %v46, 2
    %v48 = vadd.f32 %v46, %v47
    %v49 = vrot.slane %v48, 1
    %v50 = vadd.f32 %v48, %v49
    %v51 = vlaneseq
    %v52 = vshrl.u32 %v51, 7
    %v53 = vadd.s32 %v52, 8
    %v54 = vld [vmem:[%s1] sm:$0x1]
    %v55 = vlaneseq
    %v56 = vshrl.u32 %v55, 7
    %v57 = vsub.s32 0, %v56
    %v58 = vrot.slane %v54, %v57
    %vm59 = vcmp.eq.s32.totalorder %v52, %v58
    %vm60 = vcmp.eq.s32.totalorder %v53, %v58
    %v61 = vsel %vm59, %v40, 0.0
    %v62 = vsel %vm60, %v42, 0.0
    %v63 = vsel %vm28, %v62, 0.0
    %v64 = vadd.f32 %v61, %v63
    %v65 = vrot.slane %v64, 4
    %v66 = vadd.f32 %v64, %v65
    %v67 = vrot.slane %v66, 2
    %v68 = vadd.f32 %v66, %v67
    %v69 = vrot.slane %v68, 1
    %v70 = vadd.f32 %v68, %v69
    %v71 = vrcp.pop %v50
    %v72 = vmul.f32 %v70, %v71
    %v73 = vsub.f32 1.0, %v72
    %s74 = smul.u32 0, 128
    %v75 = vlaneseq
    %v76 = vand.u32 %v75, 127
    %v77 = vstv %s74
    %v78 = vadd.s32 %v77, %v76
    %vm79 = vcmp.lt.s32.totalorder %v78, 8
    %v80 = vsel %vm79, %v73, 0.0
    %vm81 = vcmask 1040384
    %v82 = vsel %vm81, %v80, 0.0
    %83 = vadd.xlane.f32.xlu0 %v82
    %v84 = vpop.xlane.xlu0 %83
    %v85 = vrot.slane %v84, 4
    %v86 = vadd.f32 %v84, %v85
    %v87 = vrot.slane %v86, 2
    %v88 = vadd.f32 %v86, %v87
    %v89 = vrot.slane %v88, 1
    %v90 = vadd.f32 %v88, %v89
    %s91 = vtos %v90
    %vm92 = vcmp.eq.s32.totalorder %v52, 0
    %vm93 = vcmp.eq.s32.totalorder %v76, 0
    %vm94 = vmand %vm92, %vm93
    %v95 = vstv %s91
    %v96 = vsel %vm94, %v95, 0.0
    %97 = vst [vmem:[#allocation5] sm:$0xff] %v96
    // Predicated region
    $region14: #{tpu_custom_call.1} parent=1 // pred_check
      _
    $region15: #{tpu_custom_call.1} parent=1 // pred_check_branch
      %99 = sbr.rel (0) target = $region17
    $region16: #{tpu_custom_call.1} parent=1 // pred_region
      %s101 = ssub.s32 128, 128
      %102 = vsyncadd [#allocation4], %s101
      %s104 = sshll.u32 [#allocation5], 4
      %s105 = int_to_ptr.vmem [resolvable:$true] %s104
      %107 = dma.vmem_to_hbm [thread:$0]  %s105, 128, %s2, [#allocation4]
    $region17: #{tpu_custom_call.1} parent=1 // pred_fallthru
      _
    // Predicated region
    $region18: #{tpu_custom_call.1} parent=1 // pred_check
      _
    $region19: #{tpu_custom_call.1} parent=1 // pred_check_branch
      %109 = sbr.rel (0) target = $region21
    $region20: #{tpu_custom_call.1} parent=1 // pred_region
      %110 = dma.done [#allocation4], 128
    $region21: #{tpu_custom_call.1} parent=1 // pred_fallthru
      _
    %111 = vsyncpa [#allocation3], 1
    %112 = vsyncpa [#allocation4], 1

</llo_original>
